<compile_context>
chip_gen: v6e
topology: v6e:2x2x1
jax: 0.10.0
libtpu: 0.0.40
codegen_flags: <defaults>
</compile_context>

<pallas_src>
import functools

import jax
import jax.numpy as jnp
from jax.experimental import pallas as pl
from jax.experimental.pallas import tpu as pltpu

LANE = 128


def _cdiv(a, b):
    return -(-a // b)


def _round_up(a, b):
    return _cdiv(a, b) * b


def _vmem_config():
    """Generation-aware tile budget (bytes) and scoped-VMEM limit (bytes)."""
    cap = 64 * 1024 * 1024
    try:
        info = pltpu.get_tpu_info()
        cap = int(getattr(info, "vmem_capacity_bytes", cap) or cap)
    except Exception:
        pass
    # v5e/v6e (128 MiB): limit 64 MiB, tile budget ~45 MiB.
    # v7x    (64 MiB) : limit 48 MiB, tile budget ~34 MiB.
    limit = min(cap * 3 // 4, 64 * 1024 * 1024)
    budget = limit * 7 // 10
    return budget, limit


def _pick_tiles(C, HW, itemsize, budget):
    """Choose (TC, THW) channel / spatial tile extents."""
    # Worst-case per-element VMEM footprint across both passes:
    #   dx pass : dy, x, dx tiles double-buffered -> 6 * itemsize
    #   reduce  : dy, x tiles double-buffered      -> 4 * itemsize
    # plus headroom for f32 temporaries during lowering -> + 8
    per_elem = 6 * itemsize + 8
    max_elems = max(budget // per_elem, LANE)

    # Whole (C, HW) slab per batch element fits: exact full-extent block ->
    # one fully contiguous DMA per batch element, no ragged masking anywhere.
    if C * HW <= max_elems:
        return C, HW

    c_align = 8 if itemsize >= 4 else (16 if itemsize == 2 else 32)
    if C * LANE <= max_elems:
        tc = C
    else:
        tc = max(c_align, (max_elems // LANE) // c_align * c_align)
        tc = min(tc, C)
    thw = max(LANE, (max_elems // tc) // LANE * LANE)
    thw = min(thw, _round_up(HW, LANE))
    return tc, thw


# ---------------------------------------------------------------------------
# Kernel 1: per-(batch, hw-split, channel-block) reduction
#   -> sum(dy), sum(dy*(x-mean)), accumulated in narrow (TC, 1) output blocks.
#   grid = (B, n_split, n_c, n_hw); hw axis is the reduction axis (last).
# ---------------------------------------------------------------------------
def _bn_bwd_reduce_kernel(dy_ref, x_ref, mean_ref, sum_dy_ref, sum_q_ref, *,
                          hw, thw, n_hw_inner, n_hw_total, need_mask):
    s = pl.program_id(1)
    j = pl.program_id(3)

    @pl.when(j == 0)
    def _():
        sum_dy_ref[...] = jnp.zeros_like(sum_dy_ref)
        sum_q_ref[...] = jnp.zeros_like(sum_q_ref)

    dy = dy_ref[...].astype(jnp.float32)
    x = x_ref[...].astype(jnp.float32)
    q = dy * (x - mean_ref[...])

    def _acc(dyv, qv):
        # Per-tile cross-lane reduce (XLU slack) into narrow resident blocks:
        # no full-width accumulator VMEM traffic per input vreg.
        sum_dy_ref[...] += jnp.sum(dyv, axis=1, keepdims=True)
        sum_q_ref[...] += jnp.sum(qv, axis=1, keepdims=True)

    if need_mask:
        # Masking only runs on the single ragged last tile.
        t = s * n_hw_inner + j
        is_ragged = t == n_hw_total - 1

        @pl.when(is_ragged)
        def _():
            lane = jax.lax.broadcasted_iota(jnp.int32, dy.shape, 1)
            valid = (t * thw + lane) < hw
            _acc(jnp.where(valid, dy, 0.0), jnp.where(valid, q, 0.0))

        @pl.when(jnp.logical_not(is_ragged))
        def _():
            _acc(dy, q)
    else:
        _acc(dy, q)


# ---------------------------------------------------------------------------
# Kernel 2: elementwise grad_input:  dx = a*dy + b*x + c   (a,b,c per channel)
# ---------------------------------------------------------------------------
def _bn_bwd_dx_kernel(dy_ref, x_ref, a_ref, b_ref, c_ref, dx_ref):
    dy = dy_ref[...].astype(jnp.float32)
    x = x_ref[...].astype(jnp.float32)
    dx_ref[...] = (a_ref[...] * dy + b_ref[...] * x + c_ref[...]).astype(dx_ref.dtype)


# ---------------------------------------------------------------------------
# Wrapper mirroring aten.native_batch_norm_backward.default
# ---------------------------------------------------------------------------
def native_batch_norm_backward(grad_out, x, weight, running_mean, running_var,
                               save_mean, save_invstd, train, eps, output_mask,
                               _force_tiles=None):
    B, C, H, W = x.shape
    HW = H * W
    count = B * HW
    out_dtype = grad_out.dtype
    param_dtype = weight.dtype if weight is not None else grad_out.dtype

    # Native layout: (B, C, HW) is a free reshape of NCHW -- no HBM copy.
    x3 = jnp.reshape(x, (B, C, HW))
    dy3 = jnp.reshape(grad_out, (B, C, HW))

    if weight is None:
        w = jnp.ones((C,), jnp.float32)
    else:
        w = jnp.asarray(weight, jnp.float32)

    if train:
        mean = jnp.asarray(save_mean, jnp.float32)
        invstd = jnp.asarray(save_invstd, jnp.float32)
    else:
        mean = jnp.asarray(running_mean, jnp.float32)
        invstd = 1.0 / jnp.sqrt(jnp.asarray(running_var, jnp.float32) + eps)
    mean_col = mean.reshape(C, 1)

    itemsize = jnp.dtype(x.dtype).itemsize
    budget, vmem_limit = _vmem_config()
    if _force_tiles is not None:
        TC, THW = _force_tiles
    else:
        TC, THW = _pick_tiles(C, HW, itemsize, budget)
    n_c = _cdiv(C, TC)
    n_hw_total = _cdiv(HW, THW)
    need_mask = (HW % THW) != 0

    need_reduce = (train and output_mask[0]) or output_mask[1] or output_mask[2]

    sum_dy = sum_dyxmu = None
    if need_reduce:
        # Extra parallel hw-split axis so a 2-TensorCore chip (v7x) stays busy
        # when B is odd / 1; harmless on 1-TC chips.
        n_split = 2 if (B % 2 == 1 and n_hw_total % 2 == 0) else 1
        n_hw_inner = n_hw_total // n_split

        in_spec = pl.BlockSpec(
            (None, TC, THW), lambda b, s, c, j: (b, c, s * n_hw_inner + j))
        mean_spec = pl.BlockSpec((TC, 1), lambda b, s, c, j: (c, 0))
        out_spec = pl.BlockSpec((None, None, TC, 1),
                                lambda b, s, c, j: (b, s, c, 0))

        sdy_p, sq_p = pl.pallas_call(
            functools.partial(_bn_bwd_reduce_kernel,
                              hw=HW, thw=THW, n_hw_inner=n_hw_inner,
                              n_hw_total=n_hw_total, need_mask=need_mask),
            out_shape=(jax.ShapeDtypeStruct((B, n_split, C, 1), jnp.float32),
                       jax.ShapeDtypeStruct((B, n_split, C, 1), jnp.float32)),
            grid_spec=pltpu.PrefetchScalarGridSpec(
                num_scalar_prefetch=0,
                grid=(B, n_split, n_c, n_hw_inner),
                in_specs=[in_spec, in_spec, mean_spec],
                out_specs=[out_spec, out_spec]),
            compiler_params=pltpu.CompilerParams(
                dimension_semantics=("parallel", "parallel", "parallel",
                                     "arbitrary"),
                vmem_limit_bytes=vmem_limit),
        )(dy3, x3, mean_col)
        sum_dy = jnp.sum(sdy_p[..., 0], axis=(0, 1))      # (C,)
        sum_dyxmu = jnp.sum(sq_p[..., 0], axis=(0, 1))    # (C,)

    grad_input = None
    if output_mask[0]:
        a = w * invstd
        if train:
            bcoef = -w * (invstd ** 3) * sum_dyxmu / count
            ccoef = -a * sum_dy / count - bcoef * mean
        else:
            bcoef = jnp.zeros((C,), jnp.float32)
            ccoef = jnp.zeros((C,), jnp.float32)

        tile_spec = pl.BlockSpec((None, TC, THW), lambda b, c, j: (b, c, j))
        col_spec = pl.BlockSpec((TC, 1), lambda b, c, j: (c, 0))

        dx3 = pl.pallas_call(
            _bn_bwd_dx_kernel,
            out_shape=jax.ShapeDtypeStruct((B, C, HW), out_dtype),
            grid_spec=pltpu.PrefetchScalarGridSpec(
                num_scalar_prefetch=0,
                grid=(B, n_c, n_hw_total),
                in_specs=[tile_spec, tile_spec, col_spec, col_spec, col_spec],
                out_specs=pl.BlockSpec((None, TC, THW),
                                       lambda b, c, j: (b, c, j))),
            compiler_params=pltpu.CompilerParams(
                dimension_semantics=("parallel", "parallel", "parallel"),
                vmem_limit_bytes=vmem_limit),
        )(dy3, x3, a.reshape(C, 1), bcoef.reshape(C, 1), ccoef.reshape(C, 1))
        grad_input = jnp.reshape(dx3, (B, C, H, W))

    grad_weight = (sum_dyxmu * invstd).astype(param_dtype) if output_mask[1] else None
    grad_bias = sum_dy.astype(param_dtype) if output_mask[2] else None
    return grad_input, grad_weight, grad_bias


# ---------------------------------------------------------------------------
# Pure-JAX reference
# ---------------------------------------------------------------------------
def _reference(dy, x, w, mean, invstd, train):
    B, C, H, W = x.shape
    n = B * H * W
    axes = (0, 2, 3)
    m = mean.reshape(1, C, 1, 1)
    iv = invstd.reshape(1, C, 1, 1)
    sum_dy = jnp.sum(dy, axis=axes)
    sum_dy_xmu = jnp.sum(dy * (x - m), axis=axes)
    grad_bias = sum_dy
    grad_weight = sum_dy_xmu * invstd
    if train:
        grad_input = (dy - sum_dy.reshape(1, C, 1, 1) / n
                      - (x - m) * iv * iv * sum_dy_xmu.reshape(1, C, 1, 1) / n
                      ) * iv * w.reshape(1, C, 1, 1)
    else:
        grad_input = dy * iv * w.reshape(1, C, 1, 1)
    return grad_input, grad_weight, grad_bias


if __name__ == "__main__":
    key = jax.random.PRNGKey(0)

    def _run_case(B, C, H, W, train, force_tiles=None):
        k1, k2, k3, k4, k5 = jax.random.split(
            jax.random.fold_in(key, B * 10000 + C * 100 + H), 5)
        eps = 1e-5
        x = jax.random.normal(k1, (B, C, H, W), jnp.float32)
        dy = jax.random.normal(k2, (B, C, H, W), jnp.float32)
        weight = jax.random.normal(k3, (C,), jnp.float32)
        running_mean = jax.random.normal(k4, (C,), jnp.float32) * 0.1
        running_var = jnp.abs(jax.random.normal(k5, (C,), jnp.float32)) + 0.5

        save_mean = jnp.mean(x, axis=(0, 2, 3))
        save_invstd = 1.0 / jnp.sqrt(jnp.var(x, axis=(0, 2, 3)) + eps)

        gi, gw, gb = native_batch_norm_backward(
            dy, x, weight, running_mean, running_var,
            save_mean, save_invstd, train, eps, [True, True, True],
            _force_tiles=force_tiles)
        jax.block_until_ready((gi, gw, gb))

        if train:
            mean, invstd = save_mean, save_invstd
        else:
            mean = running_mean
            invstd = 1.0 / jnp.sqrt(running_var + eps)
        ref_gi, ref_gw, ref_gb = _reference(dy, x, weight, mean, invstd, train)
        assert jnp.allclose(gi, ref_gi, atol=1e-4, rtol=1e-4), "grad_input mismatch"
        assert jnp.allclose(gw, ref_gw, atol=1e-4, rtol=1e-4), "grad_weight mismatch"
        assert jnp.allclose(gb, ref_gb, atol=1e-4, rtol=1e-4), "grad_bias mismatch"

    # Primary shape implied by the module under test (train mode).
    _run_case(2, 4, 16, 16, train=True)
    # Eval-mode path + non-multiple-of-128 spatial extent (full-extent block).
    _run_case(2, 8, 7, 7, train=False)
    # Forced small tiles: exercises ragged-tile masking, narrow accumulators
    # and the 2-way hw split used to feed v7x's second TensorCore.
    _run_case(1, 8, 16, 10, train=True, force_tiles=(8, 128))

    print("KERNEL_OK")
</pallas_src>

<mosaic_0001>
module attributes {stable_mosaic.version = 11 : i64} {
  func.func @_bn_bwd_reduce_kernel(%arg0: i32, %arg1: i32, %arg2: i32, %arg3: i32, %arg4: memref<1x4x256xf32, #tpu.memory_space<vmem>>, %arg5: memref<1x4x256xf32, #tpu.memory_space<vmem>>, %arg6: memref<4x1xf32, #tpu.memory_space<vmem>>, %arg7: memref<1x1x4x1xf32, #tpu.memory_space<vmem>>, %arg8: memref<1x1x4x1xf32, #tpu.memory_space<vmem>>) attributes {dimension_semantics = [#tpu.dimension_semantics<parallel>, #tpu.dimension_semantics<parallel>, #tpu.dimension_semantics<parallel>, #tpu.dimension_semantics<arbitrary>], iteration_bounds = array<i64: 2, 1, 1, 1>, scalar_prefetch = 0 : i64, scratch_operands = 0 : i64, tpu.core_type = #tpu.core_type<tc>, window_params = [{transform_indices = @transform_0, window_bounds = array<i64: 1, 4, 256>}, {transform_indices = @transform_1, window_bounds = array<i64: 1, 4, 256>}, {transform_indices = @transform_2, window_bounds = array<i64: 4, 1>}, {transform_indices = @transform_3, window_bounds = array<i64: 1, 1, 4, 1>}, {transform_indices = @transform_4, window_bounds = array<i64: 1, 1, 4, 1>}]} {
    %c0_i32 = arith.constant 0 : i32
    %0 = arith.cmpi eq, %arg3, %c0_i32 : i32
    %1 = arith.extui %0 : i1 to i32
    %c0_i32_0 = arith.constant 0 : i32
    %2 = arith.cmpi ne, %1, %c0_i32_0 : i32
    scf.if %2 {
      %cst_25 = arith.constant 0.000000e+00 : f32
      %27 = vector.broadcast %cst_25 : f32 to vector<4x1xf32>
      %c0_26 = arith.constant 0 : index
      %c0_27 = arith.constant 0 : index
      %c0_28 = arith.constant 0 : index
      %c0_29 = arith.constant 0 : index
      %28 = vector.load %arg7[%c0_26, %c0_27, %c0_28, %c0_29] : memref<1x1x4x1xf32, #tpu.memory_space<vmem>>, vector<1x1x4x1xf32>
      %29 = vector.shape_cast %28 : vector<1x1x4x1xf32> to vector<4x1xf32>
      %30 = vector.shape_cast %27 : vector<4x1xf32> to vector<1x1x4x1xf32>
      tpu.vector_store %arg7[%c0_26, %c0_27, %c0_28, %c0_29], %30 {strides = array<i32>} : memref<1x1x4x1xf32, #tpu.memory_space<vmem>>, vector<1x1x4x1xf32>,
      %cst_30 = arith.constant 0.000000e+00 : f32
      %31 = vector.broadcast %cst_30 : f32 to vector<4x1xf32>
      %c0_31 = arith.constant 0 : index
      %c0_32 = arith.constant 0 : index
      %c0_33 = arith.constant 0 : index
      %c0_34 = arith.constant 0 : index
      %32 = vector.load %arg8[%c0_31, %c0_32, %c0_33, %c0_34] : memref<1x1x4x1xf32, #tpu.memory_space<vmem>>, vector<1x1x4x1xf32>
      %33 = vector.shape_cast %32 : vector<1x1x4x1xf32> to vector<4x1xf32>
      %34 = vector.shape_cast %31 : vector<4x1xf32> to vector<1x1x4x1xf32>
      tpu.vector_store %arg8[%c0_31, %c0_32, %c0_33, %c0_34], %34 {strides = array<i32>} : memref<1x1x4x1xf32, #tpu.memory_space<vmem>>, vector<1x1x4x1xf32>,
    } else {
    }
    %c0 = arith.constant 0 : index
    %c0_1 = arith.constant 0 : index
    %c0_2 = arith.constant 0 : index
    %3 = vector.load %arg4[%c0, %c0_1, %c0_2] : memref<1x4x256xf32, #tpu.memory_space<vmem>>, vector<1x4x256xf32>
    %4 = vector.shape_cast %3 : vector<1x4x256xf32> to vector<4x256xf32>
    %c0_3 = arith.constant 0 : index
    %c0_4 = arith.constant 0 : index
    %c0_5 = arith.constant 0 : index
    %5 = vector.load %arg5[%c0_3, %c0_4, %c0_5] : memref<1x4x256xf32, #tpu.memory_space<vmem>>, vector<1x4x256xf32>
    %6 = vector.shape_cast %5 : vector<1x4x256xf32> to vector<4x256xf32>
    %c0_6 = arith.constant 0 : index
    %c0_7 = arith.constant 0 : index
    %7 = vector.load %arg6[%c0_6, %c0_7] : memref<4x1xf32, #tpu.memory_space<vmem>>, vector<4x1xf32>
    %8 = vector.broadcast %7 : vector<4x1xf32> to vector<4x256xf32>
    %9 = arith.subf %6, %8 : vector<4x256xf32>
    %10 = arith.mulf %4, %9 : vector<4x256xf32>
    %c0_8 = arith.constant 0 : index
    %c0_9 = arith.constant 0 : index
    %c0_10 = arith.constant 0 : index
    %c0_11 = arith.constant 0 : index
    %11 = vector.load %arg7[%c0_8, %c0_9, %c0_10, %c0_11] : memref<1x1x4x1xf32, #tpu.memory_space<vmem>>, vector<1x1x4x1xf32>
    %12 = vector.shape_cast %11 : vector<1x1x4x1xf32> to vector<4x1xf32>
    %cst = arith.constant dense<0.000000e+00> : vector<4xf32>
    %13 = vector.multi_reduction <add>, %4, %cst [1] : vector<4x256xf32> to vector<4xf32>
    %14 = vector.shape_cast %13 : vector<4xf32> to vector<4x1xf32>
    %15 = arith.addf %12, %14 : vector<4x1xf32>
    %c0_12 = arith.constant 0 : index
    %c0_13 = arith.constant 0 : index
    %c0_14 = arith.constant 0 : index
    %c0_15 = arith.constant 0 : index
    %16 = vector.load %arg7[%c0_12, %c0_13, %c0_14, %c0_15] : memref<1x1x4x1xf32, #tpu.memory_space<vmem>>, vector<1x1x4x1xf32>
    %17 = vector.shape_cast %16 : vector<1x1x4x1xf32> to vector<4x1xf32>
    %18 = vector.shape_cast %15 : vector<4x1xf32> to vector<1x1x4x1xf32>
    tpu.vector_store %arg7[%c0_12, %c0_13, %c0_14, %c0_15], %18 {strides = array<i32>} : memref<1x1x4x1xf32, #tpu.memory_space<vmem>>, vector<1x1x4x1xf32>,
    %c0_16 = arith.constant 0 : index
    %c0_17 = arith.constant 0 : index
    %c0_18 = arith.constant 0 : index
    %c0_19 = arith.constant 0 : index
    %19 = vector.load %arg8[%c0_16, %c0_17, %c0_18, %c0_19] : memref<1x1x4x1xf32, #tpu.memory_space<vmem>>, vector<1x1x4x1xf32>
    %20 = vector.shape_cast %19 : vector<1x1x4x1xf32> to vector<4x1xf32>
    %cst_20 = arith.constant dense<0.000000e+00> : vector<4xf32>
    %21 = vector.multi_reduction <add>, %10, %cst_20 [1] : vector<4x256xf32> to vector<4xf32>
    %22 = vector.shape_cast %21 : vector<4xf32> to vector<4x1xf32>
    %23 = arith.addf %20, %22 : vector<4x1xf32>
    %c0_21 = arith.constant 0 : index
    %c0_22 = arith.constant 0 : index
    %c0_23 = arith.constant 0 : index
    %c0_24 = arith.constant 0 : index
    %24 = vector.load %arg8[%c0_21, %c0_22, %c0_23, %c0_24] : memref<1x1x4x1xf32, #tpu.memory_space<vmem>>, vector<1x1x4x1xf32>
    %25 = vector.shape_cast %24 : vector<1x1x4x1xf32> to vector<4x1xf32>
    %26 = vector.shape_cast %23 : vector<4x1xf32> to vector<1x1x4x1xf32>
    tpu.vector_store %arg8[%c0_21, %c0_22, %c0_23, %c0_24], %26 {strides = array<i32>} : memref<1x1x4x1xf32, #tpu.memory_space<vmem>>, vector<1x1x4x1xf32>,
    return
  }
  func.func @transform_0(%arg0: i32, %arg1: i32, %arg2: i32, %arg3: i32) -> (i32, i32, i32) {
    %c1_i32 = arith.constant 1 : i32
    %0 = arith.muli %arg1, %c1_i32 : i32
    %1 = arith.addi %0, %arg3 : i32
    %c0_i32 = arith.constant 0 : i32
    return %arg0, %arg2, %1 : i32, i32, i32
  }
  func.func @transform_1(%arg0: i32, %arg1: i32, %arg2: i32, %arg3: i32) -> (i32, i32, i32) {
    %c1_i32 = arith.constant 1 : i32
    %0 = arith.muli %arg1, %c1_i32 : i32
    %1 = arith.addi %0, %arg3 : i32
    %c0_i32 = arith.constant 0 : i32
    return %arg0, %arg2, %1 : i32, i32, i32
  }
  func.func @transform_2(%arg0: i32, %arg1: i32, %arg2: i32, %arg3: i32) -> (i32, i32) {
    %c0_i32 = arith.constant 0 : i32
    %c0_i32_0 = arith.constant 0 : i32
    return %arg2, %c0_i32 : i32, i32
  }
  func.func @transform_3(%arg0: i32, %arg1: i32, %arg2: i32, %arg3: i32) -> (i32, i32, i32, i32) {
    %c0_i32 = arith.constant 0 : i32
    %c0_i32_0 = arith.constant 0 : i32
    return %arg0, %arg1, %arg2, %c0_i32 : i32, i32, i32, i32
  }
  func.func @transform_4(%arg0: i32, %arg1: i32, %arg2: i32, %arg3: i32) -> (i32, i32, i32, i32) {
    %c0_i32 = arith.constant 0 : i32
    %c0_i32_0 = arith.constant 0 : i32
    return %arg0, %arg1, %arg2, %c0_i32 : i32, i32, i32, i32
  }
}

</mosaic_0001>

<llo_original>
// kernel: tpu_custom_call.1
$region0: #{tpu_custom_call.1}
  #allocation0 [shape = 'u32[]', space=smem, size = 0x4, offset = 0x4, fixed_abs, tag = 'smem constant byte address 0x4 - core index']
  #allocation1 [shape = 'u32[144,128]{1,0:T(1,128)}', space=vmem, size = 0x12000, scoped, tag = 'internal scratch']
  %s0 = inlined_call_operand.hbm [shape: f32[2,4,256], index: 0, kind: input, shape index: {}]
  %s1 = inlined_call_operand.hbm [shape: f32[2,4,256], index: 1, kind: input, shape index: {}]
  %s2 = inlined_call_operand.vmem [shape: f32[4,1], index: 2, kind: input, shape index: {}]
  %s3 = inlined_call_operand.vmem [shape: f32[2,1,4,1], index: 3, kind: output, shape index: {0}]
  %s4 = inlined_call_operand.vmem [shape: f32[2,1,4,1], index: 4, kind: output, shape index: {1}]
  %5 = xla_tuple %s3, %s4
  %s6 = sld [smem:[#allocation0]]
  $region65: #{tpu_custom_call.1} parent=0
    _
  %s8 = ssub.s32 1, %s6
  %s9 = scalar_select 0, %s8, %s6
  $region1: #{tpu_custom_call.1} parent=0
    #allocation2 [shape = 'u8[8192]{0}', space=vmem, size = 0x2000, scoped, tag = 'input window, operand 0']
    #allocation3 [shape = 's32[2]{0}', space=sflag, size = 0x8, scoped, tag = 'scoped memory for tpu_custom_call.1']
    #allocation4 [shape = 'u8[8192]{0}', space=vmem, size = 0x2000, scoped, tag = 'input window, operand 1']
    #allocation5 [shape = 's32[2]{0}', space=sflag, size = 0x8, scoped, tag = 'scoped memory for tpu_custom_call.1']
    %10 = vsyncpa [#allocation3], 0
    %s11 = scalar_lea.sflag [#allocation3], 1
    %12 = vsyncpa %s11, 0
    %13 = vsyncpa [#allocation5], 0
    %s14 = scalar_lea.sflag [#allocation5], 1
    %15 = vsyncpa %s14, 0
    loop: start=0, step=1, limit=4
    $region2: #{tpu_custom_call.1} parent=1 // loop_pre_header
      _
    $region3: #{tpu_custom_call.1} parent=1 // loop_header
      %s17 = sphi 0, %s21
      %p18 = scmp.ge.s32.totalorder %s17, 4
      %s24 = sphi 0, %s50
      %s25 = sphi 0, %s46
      %s26 = sphi 0, %s42
      %s27 = sphi 0, %s38
      %s28 = sphi 0, %s24
      %s29 = sphi 0, %s25
      %s30 = sphi 0, %s26
      %s31 = sphi 0, %s27
      %s32 = sphi 0, %s28
      %s33 = sphi 0, %s29
      %s34 = sphi 0, %s30
      %s35 = sphi 0, %s31
      %s59 = sphi 0, %s61
      %s62 = sphi 0, %s59
      %s63 = sphi 0, %s62
      %s79 = sphi 0, %s63
      %s91 = sphi 0, %s93
      %s94 = sphi 0, %s91
      %s95 = sphi 0, %s94
      %s111 = sphi 0, %s95
      %s117 = sphi 0, %s119
      %s120 = sphi 0, %s117
      %s121 = sphi 0, %s120
      %s137 = sphi 0, %s121
      %s147 = sphi 0, %s149
      %s150 = sphi 0, %s147
      %s151 = sphi 0, %s150
      %s167 = sphi 0, %s151
      %s177 = sphi 0, %s179
      %s180 = sphi 0, %s177
      %s181 = sphi 0, %s180
      %s197 = sphi 0, %s181
    $region4: #{tpu_custom_call.1} parent=1 // loop_header_branch
      %20 = sbr.rel (%p18) target = $region8
    $region5: #{tpu_custom_call.1} parent=1 // loop_body
      %s22 = ssub.s32 %s17, 1
      %s23 = ssub.s32 %s17, 2
      %s36 = sadd.s32 1, %s27
      %p37 = scmp.ge.s32.totalorder %s36, 1
      %s38 = scalar_select %p37, 0, %s36
      %s39 = sadd.s32 1, %s26
      %s40 = scalar_select %p37, %s39, %s26
      %p41 = scmp.ge.s32.totalorder %s40, 1
      %s42 = scalar_select %p41, 0, %s40
      %s43 = sadd.s32 1, %s25
      %s44 = scalar_select %p41, %s43, %s25
      %p45 = scmp.ge.s32.totalorder %s44, 1
      %s46 = scalar_select %p45, 0, %s44
      %s47 = sadd.s32 1, %s24
      %s48 = scalar_select %p45, %s47, %s24
      %p49 = scmp.ge.s32.totalorder %s48, 2
      %s50 = scalar_select %p49, 0, %s48
      %s51 = sadd.s32 %s25, %s27
      %s52 = sadd.s32 %s46, %s38
      %s53 = ssub.s32 %s24, %s50
      %s54 = ssub.s32 %s26, %s42
      %s55 = sor.u32 %s53, %s54
      %s56 = ssub.s32 %s51, %s52
      %s57 = sor.u32 %s55, %s56
      %p58 = scmp.eq.s32.totalorder %s57, 0
      %s60 = sadd.s32 %s59, 1
      %s61 = scalar_select %p58, %s59, %s60
      %p64 = pneg %p58
      %p65 = scmp.eq.s32.totalorder %s17, 1
      %p66 = por %p64, %p65
      %p67 = scmp.ne.s32.totalorder %s59, %s62
      %p68 = scmp.eq.s32.totalorder %s17, 0
      %p69 = por %p67, %p68
      %p70 = scmp.ne.s32.totalorder %s59, %s62
      %p71 = scmp.eq.s32.totalorder %s22, 1
      %p72 = por %p70, %p71
      %p73 = scmp.ne.s32.totalorder %s62, %s63
      %p74 = scmp.eq.s32.totalorder %s22, 0
      %p75 = por %p73, %p74
      %p76 = scmp.ne.s32.totalorder %s62, %s63
      %p77 = scmp.eq.s32.totalorder %s23, 1
      %p78 = por %p76, %p77
      %p80 = scmp.ne.s32.totalorder %s63, %s79
      %p81 = scmp.eq.s32.totalorder %s23, 0
      %p82 = por %p80, %p81
      %s83 = sadd.s32 %s25, %s27
      %s84 = sadd.s32 %s46, %s38
      %s85 = ssub.s32 %s24, %s50
      %s86 = ssub.s32 %s26, %s42
      %s87 = sor.u32 %s85, %s86
      %s88 = ssub.s32 %s83, %s84
      %s89 = sor.u32 %s87, %s88
      %p90 = scmp.eq.s32.totalorder %s89, 0
      %s92 = sadd.s32 %s91, 1
      %s93 = scalar_select %p90, %s91, %s92
      %p96 = pneg %p90
      %p97 = scmp.eq.s32.totalorder %s17, 1
      %p98 = por %p96, %p97
      %p99 = scmp.ne.s32.totalorder %s91, %s94
      %p100 = scmp.eq.s32.totalorder %s17, 0
      %p101 = por %p99, %p100
      %p102 = scmp.ne.s32.totalorder %s91, %s94
      %p103 = scmp.eq.s32.totalorder %s22, 1
      %p104 = por %p102, %p103
      %p105 = scmp.ne.s32.totalorder %s94, %s95
      %p106 = scmp.eq.s32.totalorder %s22, 0
      %p107 = por %p105, %p106
      %p108 = scmp.ne.s32.totalorder %s94, %s95
      %p109 = scmp.eq.s32.totalorder %s23, 1
      %p110 = por %p108, %p109
      %p112 = scmp.ne.s32.totalorder %s95, %s111
      %p113 = scmp.eq.s32.totalorder %s23, 0
      %p114 = por %p112, %p113
      %s115 = ssub.s32 %s26, %s42
      %p116 = scmp.eq.s32.totalorder %s115, 0
      %s118 = sadd.s32 %s117, 1
      %s119 = scalar_select %p116, %s117, %s118
      %p122 = pneg %p116
      %p123 = scmp.eq.s32.totalorder %s17, 1
      %p124 = por %p122, %p123
      %p125 = scmp.ne.s32.totalorder %s117, %s120
      %p126 = scmp.eq.s32.totalorder %s17, 0
      %p127 = por %p125, %p126
      %p128 = scmp.ne.s32.totalorder %s117, %s120
      %p129 = scmp.eq.s32.totalorder %s22, 1
      %p130 = por %p128, %p129
      %p131 = scmp.ne.s32.totalorder %s120, %s121
      %p132 = scmp.eq.s32.totalorder %s22, 0
      %p133 = por %p131, %p132
      %p134 = scmp.ne.s32.totalorder %s120, %s121
      %p135 = scmp.eq.s32.totalorder %s23, 1
      %p136 = por %p134, %p135
      %p138 = scmp.ne.s32.totalorder %s121, %s137
      %p139 = scmp.eq.s32.totalorder %s23, 0
      %p140 = por %p138, %p139
      %s141 = ssub.s32 %s24, %s50
      %s142 = ssub.s32 %s25, %s46
      %s143 = sor.u32 %s141, %s142
      %s144 = ssub.s32 %s26, %s42
      %s145 = sor.u32 %s143, %s144
      %p146 = scmp.eq.s32.totalorder %s145, 0
      %s148 = sadd.s32 %s147, 1
      %s149 = scalar_select %p146, %s147, %s148
      %p152 = pneg %p146
      %p153 = scmp.eq.s32.totalorder %s17, 1
      %p154 = por %p152, %p153
      %p155 = scmp.ne.s32.totalorder %s147, %s150
      %p156 = scmp.eq.s32.totalorder %s17, 0
      %p157 = por %p155, %p156
      %p158 = scmp.ne.s32.totalorder %s147, %s150
      %p159 = scmp.eq.s32.totalorder %s22, 1
      %p160 = por %p158, %p159
      %p161 = scmp.ne.s32.totalorder %s150, %s151
      %p162 = scmp.eq.s32.totalorder %s22, 0
      %p163 = por %p161, %p162
      %p164 = scmp.ne.s32.totalorder %s150, %s151
      %p165 = scmp.eq.s32.totalorder %s23, 1
      %p166 = por %p164, %p165
      %p168 = scmp.ne.s32.totalorder %s151, %s167
      %p169 = scmp.eq.s32.totalorder %s23, 0
      %p170 = por %p168, %p169
      %s171 = ssub.s32 %s24, %s50
      %s172 = ssub.s32 %s25, %s46
      %s173 = sor.u32 %s171, %s172
      %s174 = ssub.s32 %s26, %s42
      %s175 = sor.u32 %s173, %s174
      %p176 = scmp.eq.s32.totalorder %s175, 0
      %s178 = sadd.s32 %s177, 1
      %s179 = scalar_select %p176, %s177, %s178
      %p182 = pneg %p176
      %p183 = scmp.eq.s32.totalorder %s17, 1
      %p184 = por %p182, %p183
      %p185 = scmp.ne.s32.totalorder %s177, %s180
      %p186 = scmp.eq.s32.totalorder %s17, 0
      %p187 = por %p185, %p186
      %p188 = scmp.ne.s32.totalorder %s177, %s180
      %p189 = scmp.eq.s32.totalorder %s22, 1
      %p190 = por %p188, %p189
      %p191 = scmp.ne.s32.totalorder %s180, %s181
      %p192 = scmp.eq.s32.totalorder %s22, 0
      %p193 = por %p191, %p192
      %p194 = scmp.ne.s32.totalorder %s180, %s181
      %p195 = scmp.eq.s32.totalorder %s23, 1
      %p196 = por %p194, %p195
      %p198 = scmp.ne.s32.totalorder %s181, %s197
      %p199 = scmp.eq.s32.totalorder %s23, 0
      %p200 = por %p198, %p199
      %p201 = scmp.le.s32.totalorder 1, %s17
      %p202 = scmp.lt.s32.totalorder %s17, 3
      %p203 = pnand %p201, %p202
      %p204 = pneg %p203
      // Predicated region
      $region9: #{tpu_custom_call.1} parent=5 // pred_check
        _
      $region10: #{tpu_custom_call.1} parent=5 // pred_check_branch
        %206 = sbr.rel (%p203) target = $region12
      $region11: #{tpu_custom_call.1} parent=5 // pred_region
        %s207 = ssub.s32 %s17, 1
        // Predicated region
        $region13: #{tpu_custom_call.1} parent=11 // pred_check
          %p208 = pneg %p133
        $region14: #{tpu_custom_call.1} parent=11 // pred_check_branch
          %210 = sbr.rel (%p208) target = $region16
        $region15: #{tpu_custom_call.1} parent=11 // pred_region
          %p211 = scmp.lt.s32.totalorder %s30, 0
          %s212 = scalar_select %p211, %s30, 0
          %s213 = smul.addr %s212, 4
          %s214 = scalar_lea.vmem %s2, %s213
        $region16: #{tpu_custom_call.1} parent=11 // pred_fallthru
          _
      $region12: #{tpu_custom_call.1} parent=5 // pred_fallthru
        _
      %p215 = scmp.lt.s32.totalorder %s17, 2
      // Predicated region
      $region17: #{tpu_custom_call.1} parent=5 // pred_check
        %p216 = pneg %p215
      $region18: #{tpu_custom_call.1} parent=5 // pred_check_branch
        %218 = sbr.rel (%p216) target = $region20
      $region19: #{tpu_custom_call.1} parent=5 // pred_region
        // Predicated region
        $region21: #{tpu_custom_call.1} parent=19 // pred_check
          %p219 = pneg %p69
        $region22: #{tpu_custom_call.1} parent=19 // pred_check_branch
          %221 = sbr.rel (%p219) target = $region24
        $region23: #{tpu_custom_call.1} parent=19 // pred_region
          %s222 = sand.u32 %s59, 1
          %s223 = scalar_lea.sflag [#allocation3], %s222
          %s224 = sand.u32 %s59, 1
          %s225 = smul.addr %s224, 8
          %s226 = scalar_lea.vmem [#allocation2], %s225
          %s227 = sadd.s32 %s25, %s27
          %s228 = smul.u32 2, %s227
          %s230 = ssub.s32 128, 128
          %231 = vsyncadd %s223, %s230
          %s232 = smul.addr %s26, 2
          %s233 = sadd.s32 %s228, %s232
          %s234 = smul.addr %s24, 2
          %s235 = sadd.s32 %s233, %s234
          %s236 = smul.addr %s235, 64
          %s237 = scalar_lea.hbm %s0, %s236
          %s239 = sshll.u32 %s226, 4
          %s240 = int_to_ptr.vmem [resolvable:$true] %s239
          %242 = dma.hbm_to_vmem [thread:$0]  %s237, 128, %s240, %s223
        $region24: #{tpu_custom_call.1} parent=19 // pred_fallthru
          _
        // Predicated region
        $region25: #{tpu_custom_call.1} parent=19 // pred_check
          %p243 = pneg %p101
        $region26: #{tpu_custom_call.1} parent=19 // pred_check_branch
          %245 = sbr.rel (%p243) target = $region28
        $region27: #{tpu_custom_call.1} parent=19 // pred_region
          %s246 = sand.u32 %s91, 1
          %s247 = scalar_lea.sflag [#allocation5], %s246
          %s248 = sand.u32 %s91, 1
          %s249 = smul.addr %s248, 8
          %s250 = scalar_lea.vmem [#allocation4], %s249
          %s251 = sadd.s32 %s25, %s27
          %s252 = smul.u32 2, %s251
          %s254 = ssub.s32 128, 128
          %255 = vsyncadd %s247, %s254
          %s256 = smul.addr %s26, 2
          %s257 = sadd.s32 %s252, %s256
          %s258 = smul.addr %s24, 2
          %s259 = sadd.s32 %s257, %s258
          %s260 = smul.addr %s259, 64
          %s261 = scalar_lea.hbm %s1, %s260
          %s263 = sshll.u32 %s250, 4
          %s264 = int_to_ptr.vmem [resolvable:$true] %s263
          %266 = dma.hbm_to_vmem [thread:$0]  %s261, 128, %s264, %s247
        $region28: #{tpu_custom_call.1} parent=19 // pred_fallthru
          _
      $region20: #{tpu_custom_call.1} parent=5 // pred_fallthru
        _
      %p267 = scmp.le.s32.totalorder 1, %s17
      %p268 = scmp.lt.s32.totalorder %s17, 3
      %p269 = pnand %p267, %p268
      %p270 = pneg %p269
      // Predicated region
      $region29: #{tpu_custom_call.1} parent=5 // pred_check
        _
      $region30: #{tpu_custom_call.1} parent=5 // pred_check_branch
        %272 = sbr.rel (%p269) target = $region32
      $region31: #{tpu_custom_call.1} parent=5 // pred_region
        %s273 = ssub.s32 %s17, 1
        %s274 = sand.u32 %s62, 1
        %s275 = scalar_lea.sflag [#allocation3], %s274
        %s276 = sand.u32 %s62, 1
        %s277 = smul.addr %s276, 8
        %s278 = scalar_lea.vmem [#allocation2], %s277
        // Predicated region
        $region33: #{tpu_custom_call.1} parent=31 // pred_check
          %p279 = pneg %p75
        $region34: #{tpu_custom_call.1} parent=31 // pred_check_branch
          %281 = sbr.rel (%p279) target = $region36
        $region35: #{tpu_custom_call.1} parent=31 // pred_region
          %282 = dma.done %s275, 128
        $region36: #{tpu_custom_call.1} parent=31 // pred_fallthru
          _
        %s283 = sand.u32 %s94, 1
        %s284 = scalar_lea.sflag [#allocation5], %s283
        %s285 = sand.u32 %s94, 1
        %s286 = smul.addr %s285, 8
        %s287 = scalar_lea.vmem [#allocation4], %s286
        // Predicated region
        $region37: #{tpu_custom_call.1} parent=31 // pred_check
          %p288 = pneg %p107
        $region38: #{tpu_custom_call.1} parent=31 // pred_check_branch
          %290 = sbr.rel (%p288) target = $region40
        $region39: #{tpu_custom_call.1} parent=31 // pred_region
          %291 = dma.done %s284, 128
        $region40: #{tpu_custom_call.1} parent=31 // pred_fallthru
          _
        %s292 = sand.u32 %s62, 1
        %s293 = scalar_lea.sflag [#allocation3], %s292
        %s294 = sand.u32 %s62, 1
        %s295 = smul.addr %s294, 8
        %s296 = scalar_lea.vmem [#allocation2], %s295
        %p297 = pneg %p75
        %p298 = pneg %p72
        %s299 = sand.u32 %s94, 1
        %s300 = scalar_lea.sflag [#allocation5], %s299
        %s301 = sand.u32 %s94, 1
        %s302 = smul.addr %s301, 8
        %s303 = scalar_lea.vmem [#allocation4], %s302
        %p304 = pneg %p107
        %p305 = pneg %p104
        %p306 = scmp.lt.s32.totalorder %s30, 0
        %s307 = scalar_select %p306, %s30, 0
        %s308 = smul.addr %s307, 4
        %s309 = scalar_lea.vmem %s2, %s308
        %p310 = pneg %p133
        %p311 = pneg %p130
        %p312 = pneg %p163
        %p313 = pneg %p160
        %p314 = scmp.lt.s32.totalorder %s28, 1
        %s315 = scalar_select %p314, %s28, 1
        %p316 = scmp.lt.s32.totalorder %s29, 0
        %s317 = scalar_select %p316, %s29, 0
        %p318 = scmp.lt.s32.totalorder %s30, 0
        %s319 = scalar_select %p318, %s30, 0
        %s320 = sadd.s32 %s319, %s317
        %s321 = sadd.s32 %s320, %s315
        %s322 = smul.addr %s321, 4
        %s323 = scalar_lea.vmem %s3, %s322
        %p324 = pneg %p193
        %p325 = pneg %p190
        %p326 = scmp.lt.s32.totalorder %s28, 1
        %s327 = scalar_select %p326, %s28, 1
        %p328 = scmp.lt.s32.totalorder %s29, 0
        %s329 = scalar_select %p328, %s29, 0
        %p330 = scmp.lt.s32.totalorder %s30, 0
        %s331 = scalar_select %p330, %s30, 0
        %s332 = sadd.s32 %s331, %s329
        %s333 = sadd.s32 %s332, %s327
        %s334 = smul.addr %s333, 4
        %s335 = scalar_lea.vmem %s4, %s334
        %s336 = sadd.s32 %s29, %s31
        %s337 = smul.u32 2, %s336
        %s338 = sadd.s32 %s29, %s31
        %s339 = smul.u32 2, %s338
        %p340 = scmp.lt.s32.totalorder %s30, 0
        %s341 = scalar_select %p340, %s30, 0
        %s342 = smul.addr %s341, 4
        %s343 = scalar_lea.vmem %s2, %s342
        %p344 = scmp.lt.s32.totalorder %s28, 1
        %s345 = scalar_select %p344, %s28, 1
        %p346 = scmp.lt.s32.totalorder %s29, 0
        %s347 = scalar_select %p346, %s29, 0
        %p348 = scmp.lt.s32.totalorder %s30, 0
        %s349 = scalar_select %p348, %s30, 0
        %s350 = sadd.s32 %s349, %s347
        %s351 = sadd.s32 %s350, %s345
        %s352 = smul.addr %s351, 4
        %s353 = scalar_lea.vmem %s3, %s352
        %p354 = scmp.lt.s32.totalorder %s28, 1
        %s355 = scalar_select %p354, %s28, 1
        %p356 = scmp.lt.s32.totalorder %s29, 0
        %s357 = scalar_select %p356, %s29, 0
        %p358 = scmp.lt.s32.totalorder %s30, 0
        %s359 = scalar_select %p358, %s30, 0
        %s360 = sadd.s32 %s359, %s357
        %s361 = sadd.s32 %s360, %s355
        %s362 = smul.addr %s361, 4
        %s363 = scalar_lea.vmem %s4, %s362
        %p364 = scmp.eq.s32.totalorder %s31, 0
        // Predicated region
        $region41: #{tpu_custom_call.1} parent=31 // pred_check
          %p365 = pneg %p364
        $region42: #{tpu_custom_call.1} parent=31 // pred_check_branch
          %367 = sbr.rel (%p365) target = $region44
        $region43: #{tpu_custom_call.1} parent=31 // pred_region
          %vm368 = vcmask 3072
          %369 = vst.msk [vmem:[%s353] sm:$0xf] %vm368, 0.0
          %370 = vst.msk [vmem:[%s363] sm:$0xf] %vm368, 0.0
        $region44: #{tpu_custom_call.1} parent=31 // pred_fallthru
          _
        %v371 = vld [vmem:[%s278] sm:$0xff]
        %v372 = vld [vmem:[%s287] sm:$0xff]
        %v373 = vld [vmem:[%s343] sm:$0xf]
        %375 = vset.pattern.permute.xlu0 0
        %376 = vperm.xlu0 %375, %v373
        %v377 = vpop.permute.xlu0 %376
        %v379 = vunpack.c.l.s4 839922192
        %v380 = vunpack.c.0.s8 %v379
        %v381 = vlaneseq
        %v382 = vshrl.u32 %v381, 7
        %v383 = vsub.s32 %v380, %v382
        %v384 = vrot.slane %v377, %v383
        %v386 = vsub.f32 %v372, %v384
        %v387 = vmul.f32 %v371, %v386
        %v388 = vld [vmem:[%s353] sm:$0xf]
        %v390 = vcombine.high %v371, %v371
        %vm392 = vcmask 1043456
        %v393 = vsel %vm392, %v371, 0.0
        %v394 = vsel %vm392, %v390, 0.0
        %v395 = vadd.f32 %v393, %v394
        %396 = vadd.xlane.f32.xlu0 %v395
        %v397 = vpop.xlane.xlu0 %396
        %v398 = vadd.f32 %v388, %v397
        %vm399 = vcmask 3072
        %400 = vst.msk [vmem:[%s353] sm:$0xf] %vm399, %v398
        %v401 = vld [vmem:[%s363] sm:$0xf]
        %v403 = vcombine.high %v387, %v387
        %v405 = vsel %vm392, %v387, 0.0
        %v406 = vsel %vm392, %v403, 0.0
        %v407 = vadd.f32 %v405, %v406
        %408 = vadd.xlane.f32.xlu0 %v407
        %v409 = vpop.xlane.xlu0 %408
        %v410 = vadd.f32 %v401, %v409
        %411 = vst.msk [vmem:[%s363] sm:$0xf] %vm399, %v410
        %p412 = scmp.lt.s32.totalorder %s28, 1
        %s413 = scalar_select %p412, %s28, 1
        %p414 = scmp.lt.s32.totalorder %s29, 0
        %s415 = scalar_select %p414, %s29, 0
        %p416 = scmp.lt.s32.totalorder %s30, 0
        %s417 = scalar_select %p416, %s30, 0
        %s418 = sadd.s32 %s417, %s415
        %s419 = sadd.s32 %s418, %s413
        %s420 = smul.addr %s419, 4
        %s421 = scalar_lea.vmem %s3, %s420
        %p422 = scmp.lt.s32.totalorder %s28, 1
        %s423 = scalar_select %p422, %s28, 1
        %p424 = scmp.lt.s32.totalorder %s29, 0
        %s425 = scalar_select %p424, %s29, 0
        %p426 = scmp.lt.s32.totalorder %s30, 0
        %s427 = scalar_select %p426, %s30, 0
        %s428 = sadd.s32 %s427, %s425
        %s429 = sadd.s32 %s428, %s423
        %s430 = smul.addr %s429, 4
        %s431 = scalar_lea.vmem %s4, %s430
        // Predicated region
        $region45: #{tpu_custom_call.1} parent=31 // pred_check
          %p432 = pneg %p160
        $region46: #{tpu_custom_call.1} parent=31 // pred_check_branch
          %434 = sbr.rel (%p432) target = $region48
        $region47: #{tpu_custom_call.1} parent=31 // pred_region
          _
        $region48: #{tpu_custom_call.1} parent=31 // pred_fallthru
          _
        // Predicated region
        $region49: #{tpu_custom_call.1} parent=31 // pred_check
          %p435 = pneg %p190
        $region50: #{tpu_custom_call.1} parent=31 // pred_check_branch
          %437 = sbr.rel (%p435) target = $region52
        $region51: #{tpu_custom_call.1} parent=31 // pred_region
          _
        $region52: #{tpu_custom_call.1} parent=31 // pred_fallthru
          _
      $region32: #{tpu_custom_call.1} parent=5 // pred_fallthru
        _
      %p438 = scmp.le.s32.totalorder 2, %s17
      // Predicated region
      $region53: #{tpu_custom_call.1} parent=5 // pred_check
        %p439 = pneg %p438
      $region54: #{tpu_custom_call.1} parent=5 // pred_check_branch
        %441 = sbr.rel (%p439) target = $region56
      $region55: #{tpu_custom_call.1} parent=5 // pred_region
        %s442 = ssub.s32 %s17, 2
        // Predicated region
        $region57: #{tpu_custom_call.1} parent=55 // pred_check
          %p443 = pneg %p166
        $region58: #{tpu_custom_call.1} parent=55 // pred_check_branch
          %445 = sbr.rel (%p443) target = $region60
        $region59: #{tpu_custom_call.1} parent=55 // pred_region
          %p446 = scmp.lt.s32.totalorder %s32, 1
          %s447 = scalar_select %p446, %s32, 1
          %p448 = scmp.lt.s32.totalorder %s33, 0
          %s449 = scalar_select %p448, %s33, 0
          %p450 = scmp.lt.s32.totalorder %s34, 0
          %s451 = scalar_select %p450, %s34, 0
          %s452 = sadd.s32 %s451, %s449
          %s453 = sadd.s32 %s452, %s447
          %s454 = smul.addr %s453, 4
          %s455 = scalar_lea.vmem %s3, %s454
        $region60: #{tpu_custom_call.1} parent=55 // pred_fallthru
          _
        // Predicated region
        $region61: #{tpu_custom_call.1} parent=55 // pred_check
          %p456 = pneg %p196
        $region62: #{tpu_custom_call.1} parent=55 // pred_check_branch
          %458 = sbr.rel (%p456) target = $region64
        $region63: #{tpu_custom_call.1} parent=55 // pred_region
          %p459 = scmp.lt.s32.totalorder %s32, 1
          %s460 = scalar_select %p459, %s32, 1
          %p461 = scmp.lt.s32.totalorder %s33, 0
          %s462 = scalar_select %p461, %s33, 0
          %p463 = scmp.lt.s32.totalorder %s34, 0
          %s464 = scalar_select %p463, %s34, 0
          %s465 = sadd.s32 %s464, %s462
          %s466 = sadd.s32 %s465, %s460
          %s467 = smul.addr %s466, 4
          %s468 = scalar_lea.vmem %s4, %s467
        $region64: #{tpu_custom_call.1} parent=55 // pred_fallthru
          _
      $region56: #{tpu_custom_call.1} parent=5 // pred_fallthru
        _
    $region6: #{tpu_custom_call.1} parent=1 // loop_footer
      %s21 = sadd.s32 1, %s17
    $region7: #{tpu_custom_call.1} parent=1 // loop_footer_branch
      %16 = sbr.rel target = $region3
    $region8: #{tpu_custom_call.1} parent=1 // loop_exit
      _
    %469 = vsyncpa [#allocation3], 1
    %s470 = scalar_lea.sflag [#allocation3], 1
    %471 = vsyncpa %s470, 1
    %472 = vsyncpa [#allocation5], 1
    %s473 = scalar_lea.sflag [#allocation5], 1
    %474 = vsyncpa %s473, 1

</llo_original>
